<compile_context>
chip_gen: v7x
topology: tpu7x:2x2x1
jax: 0.10.0
libtpu: 0.0.40
codegen_flags: <defaults>
</compile_context>

<pallas_src>
import jax
import jax.numpy as jnp
from jax.experimental import pallas as pl
from jax.experimental.pallas import tpu as pltpu

INPUT_SIZE = 106
HIDDEN_SIZE = 50
NUM_CLASSES = 2
HID_PAD = 64  # 50 -> 64: sublane/MXU friendly; zero-padding is exact through dot+ReLU.


def _round_up(x, m):
    return (x + m - 1) // m * m


def mlp_kernel(x_ref, w1_ref, b1_ref, w2_ref, b2_ref, w3d_ref, b3d_ref, out_ref):
    # x arrives f32 straight from HBM; cast to bf16 in-register for the MXU.
    x = x_ref[...].astype(jnp.bfloat16)                                # (TB, 106)

    # fc1 + ReLU (bf16 MXU operands, f32 accumulation). K=106 is padded by the MXU.
    h1 = jnp.dot(x, w1_ref[...], preferred_element_type=jnp.float32) + b1_ref[...]
    h1 = jnp.maximum(h1, 0.0)                                          # (TB, 64) f32

    # fc2 + ReLU
    h2 = jnp.dot(h1.astype(jnp.bfloat16), w2_ref[...],
                 preferred_element_type=jnp.float32) + b2_ref[...]
    h2 = jnp.maximum(h2, 0.0)                                          # (TB, 64) f32

    # fc3 as class-difference matvec: d = logit1 - logit0.
    d = jnp.dot(h2.astype(jnp.bfloat16), w3d_ref[...],
                preferred_element_type=jnp.float32) + b3d_ref[...]     # (TB, 1) f32

    # 2-class closed-form log_softmax (stable softplus; no cross-lane reductions):
    #   out0 = -softplus(d),  out1 = d - softplus(d)
    m = jnp.maximum(d, 0.0)
    sp = m + jnp.log(jnp.exp(d - m) + jnp.exp(-m))
    out_ref[...] = jnp.concatenate([-sp, d - sp], axis=1)              # (TB, 2) f32


def prepare_params(params):
    """One-time prep (do at parameter-load time, NOT per forward call):
    transpose to (in, out), zero-pad hidden 50->64, cast matmul operands to bf16,
    fold fc3 into a class-difference column. Biases stay f32.
    params use PyTorch shapes: w1 (50,106), b1 (50,), w2 (50,50), b2 (50,),
    w3 (2,50), b3 (2,)."""
    w1 = jnp.zeros((INPUT_SIZE, HID_PAD), jnp.float32)
    w1 = w1.at[:, :HIDDEN_SIZE].set(params["w1"].T).astype(jnp.bfloat16)
    w2 = jnp.zeros((HID_PAD, HID_PAD), jnp.float32)
    w2 = w2.at[:HIDDEN_SIZE, :HIDDEN_SIZE].set(params["w2"].T).astype(jnp.bfloat16)
    w3d = jnp.zeros((HID_PAD, 1), jnp.float32)
    w3d = w3d.at[:HIDDEN_SIZE, 0].set(params["w3"][1] - params["w3"][0]).astype(jnp.bfloat16)
    b1 = jnp.zeros((1, HID_PAD), jnp.float32).at[0, :HIDDEN_SIZE].set(params["b1"])
    b2 = jnp.zeros((1, HID_PAD), jnp.float32).at[0, :HIDDEN_SIZE].set(params["b2"])
    b3d = (params["b3"][1] - params["b3"][0]).reshape(1, 1).astype(jnp.float32)
    return {"w1": w1, "b1": b1, "w2": w2, "b2": b2, "w3d": w3d, "b3d": b3d}


def _choose_tile_b(B, tile_b):
    tile_b = max(8, min(int(tile_b), _round_up(B, 8)))
    # Ensure >= 2 grid steps when possible so ("parallel",) can use both v7x TCs.
    tile_b = min(tile_b, _round_up(pl.cdiv(B, 2), 8))
    return _round_up(tile_b, 8)


def net_forward(x, prepared, tile_b=2048):
    """x: (B, 106) float32. prepared: output of prepare_params(). Returns (B, 2) f32
    log-probabilities (matches the PyTorch forward)."""
    B = x.shape[0]
    tb = _choose_tile_b(B, tile_b)
    grid = (pl.cdiv(B, tb),)

    flops = 2 * B * (INPUT_SIZE * HID_PAD + HID_PAD * HID_PAD + HID_PAD)
    bytes_accessed = (
        B * INPUT_SIZE * 4                                              # x (f32) in
        + B * NUM_CLASSES * 4                                           # out (f32)
        + (INPUT_SIZE * HID_PAD + HID_PAD * HID_PAD + HID_PAD) * 2      # bf16 weights
        + (2 * HID_PAD + 1) * 4                                         # f32 biases
    )

    out = pl.pallas_call(
        mlp_kernel,
        out_shape=jax.ShapeDtypeStruct((B, NUM_CLASSES), jnp.float32),
        grid=grid,
        in_specs=[
            pl.BlockSpec((tb, INPUT_SIZE), lambda i: (i, 0)),           # x: streamed
            pl.BlockSpec((INPUT_SIZE, HID_PAD), lambda i: (0, 0)),      # w1 (resident)
            pl.BlockSpec((1, HID_PAD), lambda i: (0, 0)),               # b1
            pl.BlockSpec((HID_PAD, HID_PAD), lambda i: (0, 0)),         # w2
            pl.BlockSpec((1, HID_PAD), lambda i: (0, 0)),               # b2
            pl.BlockSpec((HID_PAD, 1), lambda i: (0, 0)),               # w3 class-diff col
            pl.BlockSpec((1, 1), lambda i: (0, 0)),                     # b3 class-diff
        ],
        out_specs=pl.BlockSpec((tb, NUM_CLASSES), lambda i: (i, 0)),
        compiler_params=pltpu.CompilerParams(
            dimension_semantics=("parallel",),
            vmem_limit_bytes=32 * 1024 * 1024,
        ),
        cost_estimate=pl.CostEstimate(
            flops=flops, transcendentals=3 * B, bytes_accessed=bytes_accessed),
    )(x, prepared["w1"], prepared["b1"], prepared["w2"], prepared["b2"],
      prepared["w3d"], prepared["b3d"])
    return out


def init_params(key):
    """Deterministic synthetic init (PyTorch Linear-style uniform bounds)."""
    ks = jax.random.split(key, 6)

    def linear_init(kw, kb, fan_in, fan_out):
        bound = 1.0 / jnp.sqrt(fan_in)
        w = jax.random.uniform(kw, (fan_out, fan_in), jnp.float32, -bound, bound)
        b = jax.random.uniform(kb, (fan_out,), jnp.float32, -bound, bound)
        return w, b

    w1, b1 = linear_init(ks[0], ks[1], INPUT_SIZE, HIDDEN_SIZE)
    w2, b2 = linear_init(ks[2], ks[3], HIDDEN_SIZE, HIDDEN_SIZE)
    w3, b3 = linear_init(ks[4], ks[5], HIDDEN_SIZE, NUM_CLASSES)
    return {"w1": w1, "b1": b1, "w2": w2, "b2": b2, "w3": w3, "b3": b3}


def reference_forward_f32(x, p):
    h1 = jnp.maximum(x @ p["w1"].T + p["b1"], 0.0)
    h2 = jnp.maximum(h1 @ p["w2"].T + p["b2"], 0.0)
    logits = h2 @ p["w3"].T + p["b3"]
    return jax.nn.log_softmax(logits, axis=1)


def reference_forward_matched(x, pp):
    """Mirrors the kernel numerics: bf16 MXU operands, f32 accumulation,
    class-difference fc3, closed-form 2-class log_softmax."""
    xb = x.astype(jnp.bfloat16)
    h1 = jnp.maximum(
        jnp.dot(xb, pp["w1"], preferred_element_type=jnp.float32) + pp["b1"], 0.0)
    h2 = jnp.maximum(
        jnp.dot(h1.astype(jnp.bfloat16), pp["w2"],
                preferred_element_type=jnp.float32) + pp["b2"], 0.0)
    d = jnp.dot(h2.astype(jnp.bfloat16), pp["w3d"],
                preferred_element_type=jnp.float32) + pp["b3d"]
    m = jnp.maximum(d, 0.0)
    sp = m + jnp.log(jnp.exp(d - m) + jnp.exp(-m))
    return jnp.concatenate([-sp, d - sp], axis=1)


if __name__ == "__main__":
    key = jax.random.PRNGKey(0)
    kx, kp, kx2 = jax.random.split(key, 3)
    params = init_params(kp)
    prepared = prepare_params(params)   # one-time weight prep, hoisted out of forward

    # Small demo batch (single tile).
    B = 8
    x = jax.random.normal(kx, (B, INPUT_SIZE), dtype=jnp.float32)
    out = jax.block_until_ready(net_forward(x, prepared))
    assert out.shape == (B, NUM_CLASSES)
    assert jnp.allclose(out, reference_forward_matched(x, prepared), atol=2e-3, rtol=2e-3), \
        "mismatch vs bf16-matched reference"
    assert jnp.allclose(out, reference_forward_f32(x, params), atol=3e-2, rtol=3e-2), \
        "mismatch vs f32 reference"

    # Larger, non-multiple batch: exercises >=2 grid steps and the ragged last
    # tile (masked writes, no batch padding, no wrapper-side copy of x).
    B2 = 300
    x2 = jax.random.normal(kx2, (B2, INPUT_SIZE), dtype=jnp.float32)
    out2 = jax.block_until_ready(net_forward(x2, prepared))
    assert out2.shape == (B2, NUM_CLASSES)
    assert jnp.allclose(out2, reference_forward_matched(x2, prepared), atol=2e-3, rtol=2e-3), \
        "mismatch vs reference (gridded / ragged)"

    print("KERNEL_OK")
</pallas_src>

<mosaic_0001>
module attributes {stable_mosaic.version = 11 : i64} {
  func.func @mlp_kernel(%arg0: i32, %arg1: memref<8x106xf32, #tpu.memory_space<vmem>>, %arg2: memref<106x64xbf16, #tpu.memory_space<vmem>>, %arg3: memref<1x64xf32, #tpu.memory_space<vmem>>, %arg4: memref<64x64xbf16, #tpu.memory_space<vmem>>, %arg5: memref<1x64xf32, #tpu.memory_space<vmem>>, %arg6: memref<64x1xbf16, #tpu.memory_space<vmem>>, %arg7: memref<1x1xf32, #tpu.memory_space<vmem>>, %arg8: memref<8x2xf32, #tpu.memory_space<vmem>>) attributes {dimension_semantics = [#tpu.dimension_semantics<parallel>], iteration_bounds = array<i64: 1>, scalar_prefetch = 0 : i64, scratch_operands = 0 : i64, tpu.core_type = #tpu.core_type<tc>, window_params = [{transform_indices = @transform_0, window_bounds = array<i64: 8, 106>}, {pipeline_mode = #tpu.pipeline_mode<synchronous>, transform_indices = @transform_1, window_bounds = array<i64: 106, 64>}, {pipeline_mode = #tpu.pipeline_mode<synchronous>, transform_indices = @transform_2, window_bounds = array<i64: 1, 64>}, {pipeline_mode = #tpu.pipeline_mode<synchronous>, transform_indices = @transform_3, window_bounds = array<i64: 64, 64>}, {pipeline_mode = #tpu.pipeline_mode<synchronous>, transform_indices = @transform_4, window_bounds = array<i64: 1, 64>}, {pipeline_mode = #tpu.pipeline_mode<synchronous>, transform_indices = @transform_5, window_bounds = array<i64: 64, 1>}, {pipeline_mode = #tpu.pipeline_mode<synchronous>, transform_indices = @transform_6, window_bounds = array<i64: 1, 1>}, {transform_indices = @transform_7, window_bounds = array<i64: 8, 2>}]} {
    %c0 = arith.constant 0 : index
    %c0_0 = arith.constant 0 : index
    %0 = vector.load %arg1[%c0, %c0_0] : memref<8x106xf32, #tpu.memory_space<vmem>>, vector<8x106xf32>
    %1 = arith.truncf %0 : vector<8x106xf32> to vector<8x106xbf16>
    %c0_1 = arith.constant 0 : index
    %c0_2 = arith.constant 0 : index
    %2 = vector.load %arg2[%c0_1, %c0_2] : memref<106x64xbf16, #tpu.memory_space<vmem>>, vector<106x64xbf16>
    %cst = arith.constant dense<0.000000e+00> : vector<8x64xf32>
    %3 = tpu.matmul %1, %2, %cst {dimension_numbers = #tpu.dot_dimension_numbers<[1], [0], [0], [1], [0, 0, 1, 1], [], []>} : vector<8x106xbf16>, vector<106x64xbf16>, vector<8x64xf32> -> vector<8x64xf32>
    %c0_3 = arith.constant 0 : index
    %c0_4 = arith.constant 0 : index
    %4 = vector.load %arg3[%c0_3, %c0_4] : memref<1x64xf32, #tpu.memory_space<vmem>>, vector<1x64xf32>
    %5 = vector.broadcast %4 : vector<1x64xf32> to vector<8x64xf32>
    %6 = arith.addf %3, %5 : vector<8x64xf32>
    %cst_5 = arith.constant 0.000000e+00 : f32
    %7 = vector.broadcast %cst_5 : f32 to vector<8x64xf32>
    %8 = arith.maximumf %6, %7 : vector<8x64xf32>
    %9 = arith.truncf %8 : vector<8x64xf32> to vector<8x64xbf16>
    %c0_6 = arith.constant 0 : index
    %c0_7 = arith.constant 0 : index
    %10 = vector.load %arg4[%c0_6, %c0_7] : memref<64x64xbf16, #tpu.memory_space<vmem>>, vector<64x64xbf16>
    %cst_8 = arith.constant dense<0.000000e+00> : vector<8x64xf32>
    %11 = tpu.matmul %9, %10, %cst_8 {dimension_numbers = #tpu.dot_dimension_numbers<[1], [0], [0], [1], [0, 0, 1, 1], [], []>} : vector<8x64xbf16>, vector<64x64xbf16>, vector<8x64xf32> -> vector<8x64xf32>
    %c0_9 = arith.constant 0 : index
    %c0_10 = arith.constant 0 : index
    %12 = vector.load %arg5[%c0_9, %c0_10] : memref<1x64xf32, #tpu.memory_space<vmem>>, vector<1x64xf32>
    %13 = vector.broadcast %12 : vector<1x64xf32> to vector<8x64xf32>
    %14 = arith.addf %11, %13 : vector<8x64xf32>
    %cst_11 = arith.constant 0.000000e+00 : f32
    %15 = vector.broadcast %cst_11 : f32 to vector<8x64xf32>
    %16 = arith.maximumf %14, %15 : vector<8x64xf32>
    %17 = arith.truncf %16 : vector<8x64xf32> to vector<8x64xbf16>
    %c0_12 = arith.constant 0 : index
    %c0_13 = arith.constant 0 : index
    %18 = vector.load %arg6[%c0_12, %c0_13] : memref<64x1xbf16, #tpu.memory_space<vmem>>, vector<64x1xbf16>
    %cst_14 = arith.constant dense<0.000000e+00> : vector<8x1xf32>
    %19 = tpu.matmul %17, %18, %cst_14 {dimension_numbers = #tpu.dot_dimension_numbers<[1], [0], [0], [1], [0, 0, 1, 1], [], []>} : vector<8x64xbf16>, vector<64x1xbf16>, vector<8x1xf32> -> vector<8x1xf32>
    %c0_15 = arith.constant 0 : index
    %c0_16 = arith.constant 0 : index
    %20 = vector.load %arg7[%c0_15, %c0_16] : memref<1x1xf32, #tpu.memory_space<vmem>>, vector<1x1xf32>
    %21 = vector.broadcast %20 : vector<1x1xf32> to vector<8x1xf32>
    %22 = arith.addf %19, %21 : vector<8x1xf32>
    %cst_17 = arith.constant 0.000000e+00 : f32
    %23 = vector.broadcast %cst_17 : f32 to vector<8x1xf32>
    %24 = arith.maximumf %22, %23 : vector<8x1xf32>
    %25 = arith.subf %22, %24 : vector<8x1xf32>
    %26 = math.exp %25 : vector<8x1xf32>
    %cst_18 = arith.constant 0.000000e+00 : f32
    %27 = vector.broadcast %cst_18 : f32 to vector<8x1xf32>
    %28 = arith.subf %27, %24 : vector<8x1xf32>
    %29 = math.exp %28 : vector<8x1xf32>
    %30 = arith.addf %26, %29 : vector<8x1xf32>
    %31 = math.log %30 : vector<8x1xf32>
    %32 = arith.addf %24, %31 : vector<8x1xf32>
    %cst_19 = arith.constant 0.000000e+00 : f32
    %33 = vector.broadcast %cst_19 : f32 to vector<8x1xf32>
    %34 = arith.subf %33, %32 : vector<8x1xf32>
    %35 = arith.subf %22, %32 : vector<8x1xf32>
    %36 = tpu.concatenate %34, %35 in 1 : vector<8x1xf32>, vector<8x1xf32> -> vector<8x2xf32>
    %c0_20 = arith.constant 0 : index
    %c0_21 = arith.constant 0 : index
    %37 = vector.load %arg8[%c0_20, %c0_21] : memref<8x2xf32, #tpu.memory_space<vmem>>, vector<8x2xf32>
    tpu.vector_store %arg8[%c0_20, %c0_21], %36 {strides = array<i32>} : memref<8x2xf32, #tpu.memory_space<vmem>>, vector<8x2xf32>,
    return
  }
  func.func @transform_0(%arg0: i32) -> (i32, i32) {
    %c0_i32 = arith.constant 0 : i32
    %c0_i32_0 = arith.constant 0 : i32
    return %arg0, %c0_i32 : i32, i32
  }
  func.func @transform_1(%arg0: i32) -> (i32, i32) {
    %c0_i32 = arith.constant 0 : i32
    %c0_i32_0 = arith.constant 0 : i32
    %c0_i32_1 = arith.constant 0 : i32
    return %c0_i32, %c0_i32_0 : i32, i32
  }
  func.func @transform_2(%arg0: i32) -> (i32, i32) {
    %c0_i32 = arith.constant 0 : i32
    %c0_i32_0 = arith.constant 0 : i32
    %c0_i32_1 = arith.constant 0 : i32
    return %c0_i32, %c0_i32_0 : i32, i32
  }
  func.func @transform_3(%arg0: i32) -> (i32, i32) {
    %c0_i32 = arith.constant 0 : i32
    %c0_i32_0 = arith.constant 0 : i32
    %c0_i32_1 = arith.constant 0 : i32
    return %c0_i32, %c0_i32_0 : i32, i32
  }
  func.func @transform_4(%arg0: i32) -> (i32, i32) {
    %c0_i32 = arith.constant 0 : i32
    %c0_i32_0 = arith.constant 0 : i32
    %c0_i32_1 = arith.constant 0 : i32
    return %c0_i32, %c0_i32_0 : i32, i32
  }
  func.func @transform_5(%arg0: i32) -> (i32, i32) {
    %c0_i32 = arith.constant 0 : i32
    %c0_i32_0 = arith.constant 0 : i32
    %c0_i32_1 = arith.constant 0 : i32
    return %c0_i32, %c0_i32_0 : i32, i32
  }
  func.func @transform_6(%arg0: i32) -> (i32, i32) {
    %c0_i32 = arith.constant 0 : i32
    %c0_i32_0 = arith.constant 0 : i32
    %c0_i32_1 = arith.constant 0 : i32
    return %c0_i32, %c0_i32_0 : i32, i32
  }
  func.func @transform_7(%arg0: i32) -> (i32, i32) {
    %c0_i32 = arith.constant 0 : i32
    %c0_i32_0 = arith.constant 0 : i32
    return %arg0, %c0_i32 : i32, i32
  }
}

</mosaic_0001>

<llo_original>
// kernel: tpu_custom_call.1
$region0: #{tpu_custom_call.1}
  #allocation0 [shape = 'u32[]', space=smem, size = 0x4, offset = 0x4, fixed_abs, tag = 'smem constant byte address 0x4 - core index']
  #allocation1 [shape = 'u32[144,128]{1,0:T(1,128)}', space=vmem, size = 0x12000, scoped, tag = 'internal scratch']
  #allocation2 [shape = 'f32[1,1]{1,0:T(1,128)S(1)}', space=vmem, size = 0x200, scoped, tag = 'scoped memory for tpu_custom_call.1']
  %s0 = inlined_call_operand.vmem [shape: f32[8,106], index: 0, kind: input, shape index: {}]
  %s1 = inlined_call_operand.vmem [shape: bf16[106,64], index: 1, kind: input, shape index: {}]
  %s2 = inlined_call_operand.vmem [shape: f32[1,64], index: 2, kind: input, shape index: {}]
  %s3 = inlined_call_operand.vmem [shape: bf16[64,64], index: 3, kind: input, shape index: {}]
  %s4 = inlined_call_operand.vmem [shape: f32[1,64], index: 4, kind: input, shape index: {}]
  %s5 = inlined_call_operand.vmem [shape: bf16[64,1], index: 5, kind: input, shape index: {}]
  %s6 = inlined_call_operand.<no memory space> [shape: f32[1,1], index: 6, kind: input, shape index: {}]
  %s7 = inlined_call_operand.vmem [shape: f32[8,2], index: 7, kind: output, shape index: {}]
  %s8 = sld [smem:[#allocation0]]
  $region38: #{tpu_custom_call.1} parent=0
    _
  %s10 = ssub.s32 1, %s8
  %s11 = scalar_select 0, %s10, %s8
  %v12 = vstv %s6
  %13 = vst [vmem:[#allocation2] sm:$0x1] %v12
  // Predicated region
  $region2: #{tpu_custom_call.1} parent=0 // pred_check
    _
  $region3: #{tpu_custom_call.1} parent=0 // pred_check_branch
    %15 = sbr.rel (0) target = $region5
  $region4: #{tpu_custom_call.1} parent=0 // pred_region
    _
  $region5: #{tpu_custom_call.1} parent=0 // pred_fallthru
    _
  // Predicated region
  $region6: #{tpu_custom_call.1} parent=0 // pred_check
    _
  $region7: #{tpu_custom_call.1} parent=0 // pred_check_branch
    %17 = sbr.rel (0) target = $region9
  $region8: #{tpu_custom_call.1} parent=0 // pred_region
    _
  $region9: #{tpu_custom_call.1} parent=0 // pred_fallthru
    _
  // Predicated region
  $region10: #{tpu_custom_call.1} parent=0 // pred_check
    _
  $region11: #{tpu_custom_call.1} parent=0 // pred_check_branch
    %19 = sbr.rel (0) target = $region13
  $region12: #{tpu_custom_call.1} parent=0 // pred_region
    _
  $region13: #{tpu_custom_call.1} parent=0 // pred_fallthru
    _
  // Predicated region
  $region14: #{tpu_custom_call.1} parent=0 // pred_check
    _
  $region15: #{tpu_custom_call.1} parent=0 // pred_check_branch
    %21 = sbr.rel (0) target = $region17
  $region16: #{tpu_custom_call.1} parent=0 // pred_region
    _
  $region17: #{tpu_custom_call.1} parent=0 // pred_fallthru
    _
  // Predicated region
  $region18: #{tpu_custom_call.1} parent=0 // pred_check
    _
  $region19: #{tpu_custom_call.1} parent=0 // pred_check_branch
    %23 = sbr.rel (0) target = $region21
  $region20: #{tpu_custom_call.1} parent=0 // pred_region
    _
  $region21: #{tpu_custom_call.1} parent=0 // pred_fallthru
    _
  // Predicated region
  $region22: #{tpu_custom_call.1} parent=0 // pred_check
    _
  $region23: #{tpu_custom_call.1} parent=0 // pred_check_branch
    %25 = sbr.rel (0) target = $region25
  $region24: #{tpu_custom_call.1} parent=0 // pred_region
    _
  $region25: #{tpu_custom_call.1} parent=0 // pred_fallthru
    _
  // Predicated region
  $region26: #{tpu_custom_call.1} parent=0 // pred_check
    _
  $region27: #{tpu_custom_call.1} parent=0 // pred_check_branch
    %27 = sbr.rel (0) target = $region29
  $region28: #{tpu_custom_call.1} parent=0 // pred_region
    _
  $region29: #{tpu_custom_call.1} parent=0 // pred_fallthru
    _
  %v29 = vld [vmem:[%s0] sm:$0xff]
  %v30 = vpack.c.bf16 %v29, %v29
  %v31 = vld [vmem:[%s1] sm:$0xf]
  %v32 = vld [vmem:[%s1 + $0x4] sm:$0xf]
  %v33 = vld [vmem:[%s1 + $0x8] sm:$0xf]
  %v34 = vld [vmem:[%s1 + $0xc] sm:$0xf]
  %v35 = vld [vmem:[%s1 + $0x10] sm:$0xf]
  %v36 = vld [vmem:[%s1 + $0x14] sm:$0xf]
  %v37 = vld [vmem:[%s1 + $0x18] sm:$0xf]
  %v38 = vld [vmem:[%s1 + $0x1c] sm:$0xf]
  %v39 = vld [vmem:[%s1 + $0x20] sm:$0xf]
  %v40 = vld [vmem:[%s1 + $0x24] sm:$0xf]
  %v41 = vld [vmem:[%s1 + $0x28] sm:$0xf]
  %v42 = vld [vmem:[%s1 + $0x2c] sm:$0xf]
  %v43 = vld [vmem:[%s1 + $0x30] sm:$0xf]
  %v44 = vld [vmem:[%s1 + $0x34] sm:$0x1]
  %v45 = vld [vmem:[%s2] sm:$0x1]
  %v47 = vlaneseq
  %v48 = vshrl.u32 %v47, 7
  %v49 = vsub.s32 0, %v48
  %v50 = vrot.slane %v45, %v49
  %v66 = vunpack.c.l.b16 %v31
  %v67 = vunpack.c.l.b16 %v32
  %v68 = vunpack.c.l.b16 %v33
  %v69 = vunpack.c.l.b16 %v34
  %v70 = vunpack.c.l.b16 %v35
  %v71 = vunpack.c.l.b16 %v36
  %v72 = vunpack.c.l.b16 %v37
  %v73 = vunpack.c.l.b16 %v38
  %v74 = vunpack.c.l.b16 %v39
  %v75 = vunpack.c.l.b16 %v40
  %v76 = vunpack.c.l.b16 %v41
  %v77 = vunpack.c.l.b16 %v42
  %v78 = vunpack.c.l.b16 %v43
  %v79 = vunpack.c.l.b16 %v44
  %v80 = vpack.c.b16 %v67, %v66
  %v81 = vpack.c.b16 %v69, %v68
  %v82 = vpack.c.b16 %v71, %v70
  %v83 = vpack.c.b16 %v73, %v72
  %v84 = vpack.c.b16 %v75, %v74
  %v85 = vpack.c.b16 %v77, %v76
  %v86 = vpack.c.b16 %v79, %v78
  %vm93 = vcmask 867328
  %v95 = vsel %vm93, %v30, 0
  %vm97 = vcmask 1044480
  %v99 = vsel %vm97, %v86, 0
  %101 = vmatprep.subr.bf16.mxu0 0
  %102 = vmatpush1.bf16.msra.mxu0 %v80
  %103 = vmatprep.subr.bf16.mxu0 0
  %104 = vmatpush1.bf16.msra.mxu0 %v81
  %105 = vmatprep.subr.bf16.mxu0 0
  %106 = vmatpush1.bf16.msra.mxu0 %v82
  %107 = vmatprep.subr.bf16.mxu0 0
  %108 = vmatpush1.bf16.msra.mxu0 %v83
  %109 = vmatprep.subr.bf16.mxu0 0
  %110 = vmatpush1.bf16.msra.mxu0 %v84
  %111 = vmatprep.subr.bf16.mxu0 0
  %112 = vmatpush1.bf16.msra.mxu0 %v85
  %113 = vmatprep.subr.bf16.mxu0 0
  %114 = vmatpush1.bf16.msra.mxu0 %v99
  %115 = vmatprep.subr.bf16.mxu0 0
  %116 = vmatpush1.bf16.msra.mxu0 0
  %117 = vmatprep.subr.bf16.mxu0 0
  %118 = vmatpush1.bf16.msra.mxu0 0
  %119 = vmatprep.subr.bf16.mxu0 0
  %120 = vmatpush1.bf16.msra.mxu0 0
  %121 = vmatprep.subr.bf16.mxu0 0
  %122 = vmatpush1.bf16.msra.mxu0 0
  %123 = vmatprep.subr.bf16.mxu0 0
  %124 = vmatpush1.bf16.msra.mxu0 0
  %125 = vmatprep.subr.bf16.mxu0 0
  %126 = vmatpush1.bf16.msra.mxu0 0
  %127 = vmatprep.subr.bf16.mxu0 0
  %128 = vmatpush1.bf16.msra.mxu0 0
  %129 = vmatprep.subr.bf16.mxu0 0
  %130 = vmatpush1.bf16.msra.mxu0 0
  %131 = vmatprep.subr.bf16.mxu0 0
  %132 = vmatpush1.bf16.msra.mxu0 0
  %133 = vmatprep.mubr.bf16.mxu0 0
  %134 = vmatmul.mubr.bf16.gmra.mrb[0].mxu0 %v95
  %v135 = vpop.f32.mrb[0].mxu0
  %v136 = vadd.f32 %v50, %v135
  %v137 = vpop.f32.mrb[0].mxu0
  %v138 = vpop.f32.mrb[0].mxu0
  %v139 = vpop.f32.mrb[0].mxu0
  %140 = vdwg.mxu0
  %v141 = vmax.f32 %v136, 0.0
  %v142 = vpack.c.bf16 %v141, %v141
  %v143 = vld [vmem:[%s3] sm:$0xf]
  %v144 = vld [vmem:[%s3 + $0x4] sm:$0xf]
  %v145 = vld [vmem:[%s3 + $0x8] sm:$0xf]
  %v146 = vld [vmem:[%s3 + $0xc] sm:$0xf]
  %v147 = vld [vmem:[%s3 + $0x10] sm:$0xf]
  %v148 = vld [vmem:[%s3 + $0x14] sm:$0xf]
  %v149 = vld [vmem:[%s3 + $0x18] sm:$0xf]
  %v150 = vld [vmem:[%s3 + $0x1c] sm:$0xf]
  %v151 = vld [vmem:[%s4] sm:$0x1]
  %v153 = vlaneseq
  %v154 = vshrl.u32 %v153, 7
  %v155 = vsub.s32 0, %v154
  %v156 = vrot.slane %v151, %v155
  %v166 = vunpack.c.l.b16 %v143
  %v167 = vunpack.c.l.b16 %v144
  %v168 = vunpack.c.l.b16 %v145
  %v169 = vunpack.c.l.b16 %v146
  %v170 = vunpack.c.l.b16 %v147
  %v171 = vunpack.c.l.b16 %v148
  %v172 = vunpack.c.l.b16 %v149
  %v173 = vunpack.c.l.b16 %v150
  %v174 = vpack.c.b16 %v167, %v166
  %v175 = vpack.c.b16 %v169, %v168
  %v176 = vpack.c.b16 %v171, %v170
  %v177 = vpack.c.b16 %v173, %v172
  %vm182 = vcmask 523264
  %v184 = vsel %vm182, %v142, 0
  %186 = vmatprep.subr.bf16.mxu0 0
  %187 = vmatpush1.bf16.msra.mxu0 %v174
  %188 = vmatprep.subr.bf16.mxu0 0
  %189 = vmatpush1.bf16.msra.mxu0 %v175
  %190 = vmatprep.subr.bf16.mxu0 0
  %191 = vmatpush1.bf16.msra.mxu0 %v176
  %192 = vmatprep.subr.bf16.mxu0 0
  %193 = vmatpush1.bf16.msra.mxu0 %v177
  %194 = vmatprep.subr.bf16.mxu0 0
  %195 = vmatpush1.bf16.msra.mxu0 0
  %196 = vmatprep.subr.bf16.mxu0 0
  %197 = vmatpush1.bf16.msra.mxu0 0
  %198 = vmatprep.subr.bf16.mxu0 0
  %199 = vmatpush1.bf16.msra.mxu0 0
  %200 = vmatprep.subr.bf16.mxu0 0
  %201 = vmatpush1.bf16.msra.mxu0 0
  %202 = vmatprep.subr.bf16.mxu0 0
  %203 = vmatpush1.bf16.msra.mxu0 0
  %204 = vmatprep.subr.bf16.mxu0 0
  %205 = vmatpush1.bf16.msra.mxu0 0
  %206 = vmatprep.subr.bf16.mxu0 0
  %207 = vmatpush1.bf16.msra.mxu0 0
  %208 = vmatprep.subr.bf16.mxu0 0
  %209 = vmatpush1.bf16.msra.mxu0 0
  %210 = vmatprep.subr.bf16.mxu0 0
  %211 = vmatpush1.bf16.msra.mxu0 0
  %212 = vmatprep.subr.bf16.mxu0 0
  %213 = vmatpush1.bf16.msra.mxu0 0
  %214 = vmatprep.subr.bf16.mxu0 0
  %215 = vmatpush1.bf16.msra.mxu0 0
  %216 = vmatprep.subr.bf16.mxu0 0
  %217 = vmatpush1.bf16.msra.mxu0 0
  %218 = vmatprep.mubr.bf16.mxu0 0
  %219 = vmatmul.mubr.bf16.gmra.mrb[0].mxu0 %v184
  %v220 = vpop.f32.mrb[0].mxu0
  %v221 = vadd.f32 %v156, %v220
  %v222 = vpop.f32.mrb[0].mxu0
  %v223 = vpop.f32.mrb[0].mxu0
  %v224 = vpop.f32.mrb[0].mxu0
  %225 = vdwg.mxu0
  %v226 = vmax.f32 %v221, 0.0
  %v227 = vpack.c.bf16 %v226, %v226
  %v228 = vld [vmem:[%s5] sm:$0xf]
  %v229 = vld [vmem:[%s5 + $0x4] sm:$0xf]
  %v230 = vld [vmem:[%s5 + $0x8] sm:$0xf]
  %v231 = vld [vmem:[%s5 + $0xc] sm:$0xf]
  %v232 = vld [vmem:[%s5 + $0x10] sm:$0xf]
  %v233 = vld [vmem:[%s5 + $0x14] sm:$0xf]
  %v234 = vld [vmem:[%s5 + $0x18] sm:$0xf]
  %v235 = vld [vmem:[%s5 + $0x1c] sm:$0xf]
  %v236 = vld [vmem:[#allocation2] sm:$0x1]
  %v238 = vlaneseq
  %v239 = vshrl.u32 %v238, 7
  %v240 = vsub.s32 0, %v239
  %v241 = vrot.slane %v236, %v240
  %v251 = vunpack.c.l.b16 %v228
  %v252 = vunpack.c.l.b16 %v229
  %v253 = vunpack.c.l.b16 %v230
  %v254 = vunpack.c.l.b16 %v231
  %v255 = vunpack.c.l.b16 %v232
  %v256 = vunpack.c.l.b16 %v233
  %v257 = vunpack.c.l.b16 %v234
  %v258 = vunpack.c.l.b16 %v235
  %v259 = vpack.c.b16 %v252, %v251
  %v260 = vpack.c.b16 %v254, %v253
  %v261 = vpack.c.b16 %v256, %v255
  %v262 = vpack.c.b16 %v258, %v257
  %v268 = vsel %vm182, %v227, 0
  %270 = vmatprep.subr.bf16.mxu0 0
  %271 = vmatpush1.bf16.msra.mxu0 %v259
  %272 = vmatprep.subr.bf16.mxu0 0
  %273 = vmatpush1.bf16.msra.mxu0 %v260
  %274 = vmatprep.subr.bf16.mxu0 0
  %275 = vmatpush1.bf16.msra.mxu0 %v261
  %276 = vmatprep.subr.bf16.mxu0 0
  %277 = vmatpush1.bf16.msra.mxu0 %v262
  %278 = vmatprep.subr.bf16.mxu0 0
  %279 = vmatpush1.bf16.msra.mxu0 0
  %280 = vmatprep.subr.bf16.mxu0 0
  %281 = vmatpush1.bf16.msra.mxu0 0
  %282 = vmatprep.subr.bf16.mxu0 0
  %283 = vmatpush1.bf16.msra.mxu0 0
  %284 = vmatprep.subr.bf16.mxu0 0
  %285 = vmatpush1.bf16.msra.mxu0 0
  %286 = vmatprep.subr.bf16.mxu0 0
  %287 = vmatpush1.bf16.msra.mxu0 0
  %288 = vmatprep.subr.bf16.mxu0 0
  %289 = vmatpush1.bf16.msra.mxu0 0
  %290 = vmatprep.subr.bf16.mxu0 0
  %291 = vmatpush1.bf16.msra.mxu0 0
  %292 = vmatprep.subr.bf16.mxu0 0
  %293 = vmatpush1.bf16.msra.mxu0 0
  %294 = vmatprep.subr.bf16.mxu0 0
  %295 = vmatpush1.bf16.msra.mxu0 0
  %296 = vmatprep.subr.bf16.mxu0 0
  %297 = vmatpush1.bf16.msra.mxu0 0
  %298 = vmatprep.subr.bf16.mxu0 0
  %299 = vmatpush1.bf16.msra.mxu0 0
  %300 = vmatprep.subr.bf16.mxu0 0
  %301 = vmatpush1.bf16.msra.mxu0 0
  %302 = vmatprep.mubr.bf16.mxu0 0
  %303 = vmatmul.mubr.bf16.gmra.mrb[0].mxu0 %v268
  %v304 = vpop.f32.mrb[0].mxu0
  %v305 = vadd.f32 %v241, %v304
  %v306 = vpop.f32.mrb[0].mxu0
  %v307 = vpop.f32.mrb[0].mxu0
  %v308 = vpop.f32.mrb[0].mxu0
  %309 = vdwg.mxu0
  %v310 = vmax.f32 %v305, 0.0
  %v311 = vsub.f32 %v305, %v310
  %v312 = vmul.f32 %v311, 1.442695
  %v313 = vpow.pop %v312
  %v314 = vsub.f32 0.0, %v310
  %v315 = vmul.f32 %v314, 1.442695
  %v316 = vpow.pop %v315
  %v317 = vadd.f32 %v313, %v316
  %v318 = vlog2.pop %v317
  %v319 = vmul.f32 %v318, 0.6931472
  %v320 = vadd.f32 %v310, %v319
  %v321 = vsub.f32 0.0, %v320
  %v322 = vsub.f32 %v305, %v320
  %324 = vrot.lane.b32.xlu0 %v322, 1
  %v325 = vpop.permute.xlu0 %324
  %vm327 = vcmask 7168
  %v328 = vsel %vm327, %v321, %v325
  %vm329 = vcmask 15360
  %330 = vst.msk [vmem:[%s7] sm:$0xff] %vm329, %v328
  // Predicated region
  $region30: #{tpu_custom_call.1} parent=0 // pred_check
    _
  $region31: #{tpu_custom_call.1} parent=0 // pred_check_branch
    %332 = sbr.rel (0) target = $region33
  $region32: #{tpu_custom_call.1} parent=0 // pred_region
    _
  $region33: #{tpu_custom_call.1} parent=0 // pred_fallthru
    _
  // Predicated region
  $region34: #{tpu_custom_call.1} parent=0 // pred_check
    _
  $region35: #{tpu_custom_call.1} parent=0 // pred_check_branch
    %334 = sbr.rel (0) target = $region37
  $region36: #{tpu_custom_call.1} parent=0 // pred_region
    _
  $region37: #{tpu_custom_call.1} parent=0 // pred_fallthru
    _

</llo_original>
